<compile_context>
chip_gen: v7x
topology: tpu7x:2x2x1
jax: 0.10.0
libtpu: 0.0.40
codegen_flags: <defaults>
</compile_context>

<pallas_src>
import jax
import jax.numpy as jnp
from jax.experimental import pallas as pl
from jax.experimental.pallas import tpu as pltpu


def _frm_kernel(x_ref, wt_ref, b_ref, o_ref):
    # x_ref: (Bb, C, T)   wt_ref: (C, C) == W^T / T   b_ref: (1, C)   o_ref: (Bb, C, T)
    # adaptive_avg_pool1d: per-(row, channel) sum with f32 accumulation; the
    # 1/T is folded into wt.  No full-slab f32 copy is kept alive.
    sums = jnp.sum(x_ref[...], axis=-1, dtype=jnp.float32)          # (Bb, C)  XLU reduce
    # nn.Linear on the pooled features: one (Bb, C) x (C, C) MXU matmul.
    z = jnp.dot(sums, wt_ref[...],
                preferred_element_type=jnp.float32) + b_ref[...]    # (Bb, C)
    y = jax.nn.sigmoid(z).astype(o_ref.dtype)[:, :, None]           # (Bb, C, 1)  EUP
    # do_mul then do_add; second read of x_ref stays in its native dtype.
    o_ref[...] = x_ref[...] * y + y                                 # VPU


def _vmem_budget():
    """(vmem_limit_bytes, target slab bytes) derived from this chip's VMEM."""
    phys = None
    try:
        info = pltpu.get_tpu_info()
        phys = getattr(info, "vmem_capacity_bytes", None)
    except Exception:
        phys = None
    if phys is None:
        # Conservative default: assume the smallest per-TC VMEM (v7x, 64 MiB).
        phys = 64 * 1024 * 1024
    if phys >= 128 * 1024 * 1024:          # v5e / v6e
        return 64 * 1024 * 1024, 8 * 1024 * 1024
    return 48 * 1024 * 1024, 6 * 1024 * 1024   # v7x (64 MiB per TC)


def _pick_block_rows(B, C, T, itemsize, target_bytes):
    """Rows per block: largest divisor of B whose slab fits ~target_bytes,
    keeping >= 2 grid steps when B >= 2 and preferring an even step count so
    the 'parallel' batch axis shards evenly across v7x's two TensorCores."""
    row_bytes = max(C * T * itemsize, 1)
    cap = max(1, target_bytes // row_bytes)
    divs = [d for d in range(1, B + 1) if B % d == 0]
    cands = [d for d in divs if d <= cap] or [1]
    if B >= 2:
        multi = [d for d in cands if B // d >= 2]
        if multi:
            cands = multi
    best = max(cands)
    even = [d for d in cands if (B // d) % 2 == 0]
    # Accept an even-step candidate unless it would shrink the slab > 2x.
    if even and max(even) * 2 >= best:
        best = max(even)
    return best


def frm_forward(x, w, b, *, block_rows=None, donate_x=False):
    """x: (B, C, T), w: (C, C) torch-style (out, in), b: (C,)  ->  (B, C, T).

    block_rows (if given) must divide B exactly (no ragged tail blocks).
    donate_x=True aliases the output onto x's buffer (only safe if the caller
    donates x and never reads it again).
    """
    B, C, T = x.shape
    itemsize = jnp.dtype(x.dtype).itemsize
    vmem_limit, target_bytes = _vmem_budget()

    # Guard: a single (C, T) row, double-buffered in + out, must fit the
    # scoped VMEM budget (with slack for W, bias, and compiler temps).
    row_bytes = C * T * itemsize
    slack = 2 * 1024 * 1024
    if 4 * row_bytes + slack > vmem_limit:
        # TODO(synk): implement the two-pass / T-tiled variant for rows this
        # large instead of erroring out.
        raise ValueError(
            f"FRM: a single (C={C}, T={T}) row ({row_bytes / 2**20:.1f} MiB) does not "
            f"fit the {vmem_limit / 2**20:.0f} MiB scoped VMEM budget on this TPU "
            "generation; the two-pass / T-tiled variant is required.")

    bb = (_pick_block_rows(B, C, T, itemsize, target_bytes)
          if block_rows is None else block_rows)
    assert B % bb == 0, "block_rows must divide the batch dimension (no ragged tail)"

    # Fold the transpose of nn.Linear's weight and the 1/T of the mean into
    # the operand (kept in f32):  sum(x,-1) @ (W^T/T) + b == mean(x,-1) @ W^T + b.
    wt = w.T.astype(jnp.float32) / jnp.float32(T)           # (C, C)
    b2 = b.astype(jnp.float32).reshape(1, C)                 # (1, C)

    # NOTE: if slabs ever have to stay small (tight VMEM), deepening the input
    # prefetch with pipeline_mode=pl.Buffered(3) on the x spec helps hide the
    # per-step issue bubble; with ~6-8 MiB slabs it is unnecessary.
    return pl.pallas_call(
        _frm_kernel,
        out_shape=jax.ShapeDtypeStruct((B, C, T), x.dtype),
        grid_spec=pltpu.PrefetchScalarGridSpec(
            num_scalar_prefetch=0,
            grid=(B // bb,),
            in_specs=[
                pl.BlockSpec((bb, C, T), lambda i: (i, 0, 0)),   # x slab per step
                pl.BlockSpec((C, C), lambda i: (0, 0)),          # W^T / T, resident
                pl.BlockSpec((1, C), lambda i: (0, 0)),          # bias, resident
            ],
            out_specs=pl.BlockSpec((bb, C, T), lambda i: (i, 0, 0)),
        ),
        compiler_params=pltpu.CompilerParams(
            dimension_semantics=("parallel",),
            vmem_limit_bytes=vmem_limit,
        ),
        input_output_aliases=({0: 0} if donate_x else {}),
    )(x, wt, b2)


def frm_reference(x, w, b):
    m = jnp.mean(x, axis=-1)                          # (B, C)
    y = jax.nn.sigmoid(m @ w.T + b)[:, :, None]       # (B, C, 1)
    return x * y + y


if __name__ == "__main__":
    key = jax.random.PRNGKey(0)
    # batch, nb_dim channels, time (T % 128 == 0 -> lane-dense stores)
    B, C, T = 4, 16, 256

    kx, kw, kb = jax.random.split(key, 3)
    x = jax.random.normal(kx, (B, C, T), dtype=jnp.float32)
    # deterministic nn.Linear(nb_dim, nb_dim) parameters (uniform, PyTorch-style scale)
    bound = 1.0 / jnp.sqrt(jnp.float32(C))
    w = jax.random.uniform(kw, (C, C), minval=-bound, maxval=bound, dtype=jnp.float32)
    b = jax.random.uniform(kb, (C,), minval=-bound, maxval=bound, dtype=jnp.float32)

    out = jax.block_until_ready(frm_forward(x, w, b))
    ref = frm_reference(x, w, b)

    assert out.shape == (B, C, T)
    assert jnp.allclose(out, ref, atol=1e-5, rtol=1e-5), "mismatch vs reference"

    print("KERNEL_OK")
</pallas_src>

<mosaic_0001>
module attributes {stable_mosaic.version = 11 : i64} {
  func.func @_frm_kernel(%arg0: i32, %arg1: memref<2x16x256xf32, #tpu.memory_space<vmem>>, %arg2: memref<16x16xf32, #tpu.memory_space<vmem>>, %arg3: memref<1x16xf32, #tpu.memory_space<vmem>>, %arg4: memref<2x16x256xf32, #tpu.memory_space<vmem>>) attributes {dimension_semantics = [#tpu.dimension_semantics<parallel>], iteration_bounds = array<i64: 2>, scalar_prefetch = 0 : i64, scratch_operands = 0 : i64, tpu.core_type = #tpu.core_type<tc>, window_params = [{transform_indices = @transform_0, window_bounds = array<i64: 2, 16, 256>}, {pipeline_mode = #tpu.pipeline_mode<synchronous>, transform_indices = @transform_1, window_bounds = array<i64: 16, 16>}, {pipeline_mode = #tpu.pipeline_mode<synchronous>, transform_indices = @transform_2, window_bounds = array<i64: 1, 16>}, {transform_indices = @transform_3, window_bounds = array<i64: 2, 16, 256>}]} {
    %c0 = arith.constant 0 : index
    %c0_0 = arith.constant 0 : index
    %c0_1 = arith.constant 0 : index
    %0 = vector.load %arg1[%c0, %c0_0, %c0_1] : memref<2x16x256xf32, #tpu.memory_space<vmem>>, vector<2x16x256xf32>
    %cst = arith.constant dense<0.000000e+00> : vector<2x16xf32>
    %1 = vector.multi_reduction <add>, %0, %cst [2] : vector<2x16x256xf32> to vector<2x16xf32>
    %c0_2 = arith.constant 0 : index
    %c0_3 = arith.constant 0 : index
    %2 = vector.load %arg2[%c0_2, %c0_3] : memref<16x16xf32, #tpu.memory_space<vmem>>, vector<16x16xf32>
    %cst_4 = arith.constant dense<0.000000e+00> : vector<2x16xf32>
    %3 = tpu.matmul %1, %2, %cst_4 {dimension_numbers = #tpu.dot_dimension_numbers<[1], [0], [0], [1], [0, 0, 1, 1], [], []>} : vector<2x16xf32>, vector<16x16xf32>, vector<2x16xf32> -> vector<2x16xf32>
    %c0_5 = arith.constant 0 : index
    %c0_6 = arith.constant 0 : index
    %4 = vector.load %arg3[%c0_5, %c0_6] : memref<1x16xf32, #tpu.memory_space<vmem>>, vector<1x16xf32>
    %5 = vector.broadcast %4 : vector<1x16xf32> to vector<2x16xf32>
    %6 = arith.addf %3, %5 : vector<2x16xf32>
    %7 = arith.negf %6 : vector<2x16xf32>
    %8 = math.exp %7 : vector<2x16xf32>
    %cst_7 = arith.constant 1.000000e+00 : f32
    %9 = vector.broadcast %cst_7 : f32 to vector<2x16xf32>
    %10 = arith.addf %9, %8 : vector<2x16xf32>
    %11 = arith.divf %9, %10 : vector<2x16xf32>
    %12 = vector.shape_cast %11 : vector<2x16xf32> to vector<2x16x1xf32>
    %c0_8 = arith.constant 0 : index
    %c0_9 = arith.constant 0 : index
    %c0_10 = arith.constant 0 : index
    %13 = vector.load %arg1[%c0_8, %c0_9, %c0_10] : memref<2x16x256xf32, #tpu.memory_space<vmem>>, vector<2x16x256xf32>
    %14 = vector.broadcast %12 : vector<2x16x1xf32> to vector<2x16x256xf32>
    %15 = arith.mulf %13, %14 : vector<2x16x256xf32>
    %16 = vector.broadcast %12 : vector<2x16x1xf32> to vector<2x16x256xf32>
    %17 = arith.addf %15, %16 : vector<2x16x256xf32>
    %c0_11 = arith.constant 0 : index
    %c0_12 = arith.constant 0 : index
    %c0_13 = arith.constant 0 : index
    %18 = vector.load %arg4[%c0_11, %c0_12, %c0_13] : memref<2x16x256xf32, #tpu.memory_space<vmem>>, vector<2x16x256xf32>
    tpu.vector_store %arg4[%c0_11, %c0_12, %c0_13], %17 {strides = array<i32>} : memref<2x16x256xf32, #tpu.memory_space<vmem>>, vector<2x16x256xf32>,
    return
  }
  func.func @transform_0(%arg0: i32) -> (i32, i32, i32) {
    %c0_i32 = arith.constant 0 : i32
    %c0_i32_0 = arith.constant 0 : i32
    %c0_i32_1 = arith.constant 0 : i32
    return %arg0, %c0_i32, %c0_i32_0 : i32, i32, i32
  }
  func.func @transform_1(%arg0: i32) -> (i32, i32) {
    %c0_i32 = arith.constant 0 : i32
    %c0_i32_0 = arith.constant 0 : i32
    %c0_i32_1 = arith.constant 0 : i32
    return %c0_i32, %c0_i32_0 : i32, i32
  }
  func.func @transform_2(%arg0: i32) -> (i32, i32) {
    %c0_i32 = arith.constant 0 : i32
    %c0_i32_0 = arith.constant 0 : i32
    %c0_i32_1 = arith.constant 0 : i32
    return %c0_i32, %c0_i32_0 : i32, i32
  }
  func.func @transform_3(%arg0: i32) -> (i32, i32, i32) {
    %c0_i32 = arith.constant 0 : i32
    %c0_i32_0 = arith.constant 0 : i32
    %c0_i32_1 = arith.constant 0 : i32
    return %arg0, %c0_i32, %c0_i32_0 : i32, i32, i32
  }
}

</mosaic_0001>

<llo_original>
// kernel: tpu_custom_call.1
$region0: #{tpu_custom_call.1}
  #allocation0 [shape = 'u32[]', space=smem, size = 0x4, offset = 0x4, fixed_abs, tag = 'smem constant byte address 0x4 - core index']
  #allocation1 [shape = 'u32[144,128]{1,0:T(1,128)}', space=vmem, size = 0x12000, scoped, tag = 'internal scratch']
  %s0 = inlined_call_operand.hbm [shape: f32[4,16,256], index: 0, kind: input, shape index: {}]
  %s1 = inlined_call_operand.hbm [shape: f32[16,16], index: 1, kind: input, shape index: {}]
  %s2 = inlined_call_operand.vmem [shape: f32[1,16], index: 2, kind: input, shape index: {}]
  %s3 = inlined_call_operand.hbm [shape: f32[4,16,256], index: 3, kind: output, shape index: {}]
  %s4 = sld [smem:[#allocation0]]
  $region53: #{tpu_custom_call.1} parent=0
    _
  %s6 = ssub.s32 1, %s4
  %s7 = scalar_select 0, %s6, %s4
  $region1: #{tpu_custom_call.1} parent=0
    #allocation2 [shape = 'u8[65536]{0}', space=vmem, size = 0x10000, scoped, tag = 'input window, operand 0']
    #allocation3 [shape = 's32[2]{0}', space=sflag, size = 0x8, scoped, tag = 'scoped memory for tpu_custom_call.1']
    #allocation4 [shape = 's32[2]{0}', space=sflag, size = 0x8, scoped, tag = 'scoped memory for tpu_custom_call.1']
    #allocation5 [shape = 'u8[8192]{0}', space=vmem, size = 0x2000, scoped, tag = 'input window, operand 1, single buffered']
    #allocation6 [shape = 's32[1]{0}', space=sflag, size = 0x4, scoped, tag = 'scoped memory for tpu_custom_call.1']
    #allocation7 [shape = 'u8[65536]{0}', space=vmem, size = 0x10000, scoped, tag = 'output window, operand 0']
    %8 = vsyncpa [#allocation3], 0
    %s9 = scalar_lea.sflag [#allocation3], 1
    %10 = vsyncpa %s9, 0
    %11 = vsyncpa [#allocation6], 0
    %12 = vsyncpa [#allocation4], 0
    %s13 = scalar_lea.sflag [#allocation4], 1
    %14 = vsyncpa %s13, 0
    loop: start=0, step=1, limit=4
    $region2: #{tpu_custom_call.1} parent=1 // loop_pre_header
      _
    $region3: #{tpu_custom_call.1} parent=1 // loop_header
      %s16 = sphi 0, %s20
      %p17 = scmp.ge.s32.totalorder %s16, 4
      %s26 = sphi 0, %s28
      %s29 = sphi 0, %s26
      %s30 = sphi 0, %s29
      %s46 = sphi 0, %s30
      %s50 = sphi 0, %s50
      %s52 = sphi 0, %s50
      %s53 = sphi 0, %s52
      %s67 = sphi 0, %s53
      %s71 = sphi 0, %s71
      %s73 = sphi 0, %s71
      %s74 = sphi 0, %s73
      %s88 = sphi 0, %s74
      %s94 = sphi 0, %s96
      %s97 = sphi 0, %s94
      %s98 = sphi 0, %s97
      %s114 = sphi 0, %s98
    $region4: #{tpu_custom_call.1} parent=1 // loop_header_branch
      %19 = sbr.rel (%p17) target = $region8
    $region5: #{tpu_custom_call.1} parent=1 // loop_body
      %s21 = ssub.s32 %s16, 1
      %s22 = ssub.s32 %s16, 2
      %s23 = sadd.s32 %s16, 1
      %s24 = ssub.s32 %s16, %s23
      %p25 = scmp.eq.s32.totalorder %s24, 0
      %s27 = sadd.s32 %s26, 1
      %s28 = scalar_select %p25, %s26, %s27
      %p31 = pneg %p25
      %p32 = scmp.eq.s32.totalorder %s16, 1
      %p33 = por %p31, %p32
      %p34 = scmp.ne.s32.totalorder %s26, %s29
      %p35 = scmp.eq.s32.totalorder %s16, 0
      %p36 = por %p34, %p35
      %p37 = scmp.ne.s32.totalorder %s26, %s29
      %p38 = scmp.eq.s32.totalorder %s21, 1
      %p39 = por %p37, %p38
      %p40 = scmp.ne.s32.totalorder %s29, %s30
      %p41 = scmp.eq.s32.totalorder %s21, 0
      %p42 = por %p40, %p41
      %p43 = scmp.ne.s32.totalorder %s29, %s30
      %p44 = scmp.eq.s32.totalorder %s22, 1
      %p45 = por %p43, %p44
      %p47 = scmp.ne.s32.totalorder %s30, %s46
      %p48 = scmp.eq.s32.totalorder %s22, 0
      %p49 = por %p47, %p48
      %s51 = sadd.s32 %s50, 1
      %p54 = scmp.eq.s32.totalorder %s16, 1
      %p55 = scmp.ne.s32.totalorder %s50, %s52
      %p56 = scmp.eq.s32.totalorder %s16, 0
      %p57 = por %p55, %p56
      %p58 = scmp.ne.s32.totalorder %s50, %s52
      %p59 = scmp.eq.s32.totalorder %s21, 1
      %p60 = por %p58, %p59
      %p61 = scmp.ne.s32.totalorder %s52, %s53
      %p62 = scmp.eq.s32.totalorder %s21, 0
      %p63 = por %p61, %p62
      %p64 = scmp.ne.s32.totalorder %s52, %s53
      %p65 = scmp.eq.s32.totalorder %s22, 1
      %p66 = por %p64, %p65
      %p68 = scmp.ne.s32.totalorder %s53, %s67
      %p69 = scmp.eq.s32.totalorder %s22, 0
      %p70 = por %p68, %p69
      %s72 = sadd.s32 %s71, 1
      %p75 = scmp.eq.s32.totalorder %s16, 1
      %p76 = scmp.ne.s32.totalorder %s71, %s73
      %p77 = scmp.eq.s32.totalorder %s16, 0
      %p78 = por %p76, %p77
      %p79 = scmp.ne.s32.totalorder %s71, %s73
      %p80 = scmp.eq.s32.totalorder %s21, 1
      %p81 = por %p79, %p80
      %p82 = scmp.ne.s32.totalorder %s73, %s74
      %p83 = scmp.eq.s32.totalorder %s21, 0
      %p84 = por %p82, %p83
      %p85 = scmp.ne.s32.totalorder %s73, %s74
      %p86 = scmp.eq.s32.totalorder %s22, 1
      %p87 = por %p85, %p86
      %p89 = scmp.ne.s32.totalorder %s74, %s88
      %p90 = scmp.eq.s32.totalorder %s22, 0
      %p91 = por %p89, %p90
      %s92 = ssub.s32 %s16, %s23
      %p93 = scmp.eq.s32.totalorder %s92, 0
      %s95 = sadd.s32 %s94, 1
      %s96 = scalar_select %p93, %s94, %s95
      %p99 = pneg %p93
      %p100 = scmp.eq.s32.totalorder %s16, 1
      %p101 = por %p99, %p100
      %p102 = scmp.ne.s32.totalorder %s94, %s97
      %p103 = scmp.eq.s32.totalorder %s16, 0
      %p104 = por %p102, %p103
      %p105 = scmp.ne.s32.totalorder %s94, %s97
      %p106 = scmp.eq.s32.totalorder %s21, 1
      %p107 = por %p105, %p106
      %p108 = scmp.ne.s32.totalorder %s97, %s98
      %p109 = scmp.eq.s32.totalorder %s21, 0
      %p110 = por %p108, %p109
      %p111 = scmp.ne.s32.totalorder %s97, %s98
      %p112 = scmp.eq.s32.totalorder %s22, 1
      %p113 = por %p111, %p112
      %p115 = scmp.ne.s32.totalorder %s98, %s114
      %p116 = scmp.eq.s32.totalorder %s22, 0
      %p117 = por %p115, %p116
      %p118 = scmp.le.s32.totalorder 1, %s16
      %p119 = scmp.lt.s32.totalorder %s16, 3
      %p120 = pnand %p118, %p119
      %p121 = pneg %p120
      // Predicated region
      $region9: #{tpu_custom_call.1} parent=5 // pred_check
        _
      $region10: #{tpu_custom_call.1} parent=5 // pred_check_branch
        %123 = sbr.rel (%p120) target = $region12
      $region11: #{tpu_custom_call.1} parent=5 // pred_region
        %s124 = ssub.s32 %s16, 1
        // Predicated region
        $region13: #{tpu_custom_call.1} parent=11 // pred_check
          %p125 = pneg %p63
        $region14: #{tpu_custom_call.1} parent=11 // pred_check_branch
          %127 = sbr.rel (%p125) target = $region16
        $region15: #{tpu_custom_call.1} parent=11 // pred_region
          %s129 = ssub.s32 256, 256
          %130 = vsyncadd [#allocation6], %s129
          %s131 = sshll.u32 [#allocation5], 4
          %s132 = int_to_ptr.vmem [resolvable:$true] %s131
          %137 = dma.hbm_to_vmem [thread:$0]  %s1, 256, %s132, [#allocation6], 128, 128, 8
        $region16: #{tpu_custom_call.1} parent=11 // pred_fallthru
          _
        // Predicated region
        $region17: #{tpu_custom_call.1} parent=11 // pred_check
          %p138 = pneg %p84
        $region18: #{tpu_custom_call.1} parent=11 // pred_check_branch
          %140 = sbr.rel (%p138) target = $region20
        $region19: #{tpu_custom_call.1} parent=11 // pred_region
          _
        $region20: #{tpu_custom_call.1} parent=11 // pred_fallthru
          _
      $region12: #{tpu_custom_call.1} parent=5 // pred_fallthru
        _
      %p141 = scmp.lt.s32.totalorder %s16, 2
      // Predicated region
      $region21: #{tpu_custom_call.1} parent=5 // pred_check
        %p142 = pneg %p141
      $region22: #{tpu_custom_call.1} parent=5 // pred_check_branch
        %144 = sbr.rel (%p142) target = $region24
      $region23: #{tpu_custom_call.1} parent=5 // pred_region
        // Predicated region
        $region25: #{tpu_custom_call.1} parent=23 // pred_check
          %p145 = pneg %p36
        $region26: #{tpu_custom_call.1} parent=23 // pred_check_branch
          %147 = sbr.rel (%p145) target = $region28
        $region27: #{tpu_custom_call.1} parent=23 // pred_region
          %s148 = sand.u32 %s26, 1
          %s149 = scalar_lea.sflag [#allocation3], %s148
          %s150 = sand.u32 %s26, 1
          %s151 = smul.addr %s150, 64
          %s152 = scalar_lea.vmem [#allocation2], %s151
          %s153 = smul.u32 2, %s16
          %s155 = ssub.s32 1024, 1024
          %156 = vsyncadd %s149, %s155
          %s157 = smul.addr %s153, 4
          %s158 = smul.addr %s157, 128
          %s159 = scalar_lea.hbm %s0, %s158
          %s160 = sshll.u32 %s152, 4
          %s161 = int_to_ptr.vmem [resolvable:$true] %s160
          %166 = dma.hbm_to_vmem [thread:$0]  %s159, 1024, %s161, %s149, 256, 256, 16
        $region28: #{tpu_custom_call.1} parent=23 // pred_fallthru
          _
      $region24: #{tpu_custom_call.1} parent=5 // pred_fallthru
        _
      %p167 = scmp.le.s32.totalorder 1, %s16
      %p168 = scmp.lt.s32.totalorder %s16, 3
      %p169 = pnand %p167, %p168
      %p170 = pneg %p169
      // Predicated region
      $region29: #{tpu_custom_call.1} parent=5 // pred_check
        _
      $region30: #{tpu_custom_call.1} parent=5 // pred_check_branch
        %172 = sbr.rel (%p169) target = $region32
      $region31: #{tpu_custom_call.1} parent=5 // pred_region
        %s173 = ssub.s32 %s16, 1
        %s174 = sand.u32 %s29, 1
        %s175 = scalar_lea.sflag [#allocation3], %s174
        %s176 = sand.u32 %s29, 1
        %s177 = smul.addr %s176, 64
        %s178 = scalar_lea.vmem [#allocation2], %s177
        // Predicated region
        $region33: #{tpu_custom_call.1} parent=31 // pred_check
          %p179 = pneg %p42
        $region34: #{tpu_custom_call.1} parent=31 // pred_check_branch
          %181 = sbr.rel (%p179) target = $region36
        $region35: #{tpu_custom_call.1} parent=31 // pred_region
          %182 = dma.done %s175, 1024
        $region36: #{tpu_custom_call.1} parent=31 // pred_fallthru
          _
        // Predicated region
        $region37: #{tpu_custom_call.1} parent=31 // pred_check
          %p183 = pneg %p63
        $region38: #{tpu_custom_call.1} parent=31 // pred_check_branch
          %185 = sbr.rel (%p183) target = $region40
        $region39: #{tpu_custom_call.1} parent=31 // pred_region
          %186 = dma.done [#allocation6], 256
        $region40: #{tpu_custom_call.1} parent=31 // pred_fallthru
          _
        %s187 = sand.u32 %s29, 1
        %s188 = scalar_lea.sflag [#allocation3], %s187
        %s189 = sand.u32 %s29, 1
        %s190 = smul.addr %s189, 64
        %s191 = scalar_lea.vmem [#allocation2], %s190
        %p192 = pneg %p42
        %p193 = pneg %p39
        %p194 = pneg %p63
        %p195 = pneg %p60
        %p196 = pneg %p84
        %p197 = pneg %p81
        %p198 = pneg %p110
        %p199 = pneg %p107
        %s200 = sand.u32 %s97, 1
        %s201 = scalar_lea.sflag [#allocation4], %s200
        %s202 = sand.u32 %s97, 1
        %s203 = smul.addr %s202, 64
        %s204 = scalar_lea.vmem [#allocation7], %s203
        %s205 = smul.u32 2, %s21
        %s206 = smul.u32 2, %s21
        %v207 = vld [vmem:[%s178] sm:$0xff]
        %v208 = vld [vmem:[%s178 + $0x8] sm:$0xff]
        %v209 = vld [vmem:[%s178 + $0x10] sm:$0xff]
        %v210 = vld [vmem:[%s178 + $0x18] sm:$0xff]
        %v211 = vld [vmem:[%s178 + $0x20] sm:$0xff]
        %v212 = vld [vmem:[%s178 + $0x28] sm:$0xff]
        %v213 = vld [vmem:[%s178 + $0x30] sm:$0xff]
        %v214 = vld [vmem:[%s178 + $0x38] sm:$0xff]
        %v215 = vadd.f32 %v207, %v208
        %216 = vadd.xlane.f32.xlu0 %v215
        %v217 = vpop.xlane.xlu0 %216
        %v218 = vadd.f32 %v209, %v210
        %219 = vadd.xlane.f32.xlu0 %v218
        %v220 = vpop.xlane.xlu0 %219
        %v221 = vadd.f32 %v211, %v212
        %222 = vadd.xlane.f32.xlu0 %v221
        %v223 = vpop.xlane.xlu0 %222
        %v224 = vadd.f32 %v213, %v214
        %225 = vadd.xlane.f32.xlu0 %v224
        %v226 = vpop.xlane.xlu0 %225
        %v227 = vld [vmem:[#allocation5] sm:$0xff]
        %v228 = vld [vmem:[#allocation5 + $0x8] sm:$0xff]
        %v229 = vld [vmem:[%s2] sm:$0x1]
        %v231 = vlaneseq
        %v232 = vshrl.u32 %v231, 7
        %v233 = vsub.s32 0, %v232
        %v234 = vrot.slane %v229, %v233
        %v240 = vlaneseq
        %v241 = vand.u32 %v240, 127
        %v242 = vlaneseq
        %v243 = vshrl.u32 %v242, 7
        %v244 = vsub.s32 %v241, %v243
        %v245 = vrot.slane %v217, %v244
        %v246 = vadd.s32 %v241, 4294967288
        %v247 = vlaneseq
        %v248 = vshrl.u32 %v247, 7
        %v249 = vsub.s32 %v246, %v248
        %v250 = vrot.slane %v220, %v249
        %vm251 = vcmask 130112
        %v252 = vsel %vm251, %v250, %v245
        %v253 = vlaneseq
        %v254 = vshrl.u32 %v253, 7
        %v255 = vsub.s32 %v241, %v254
        %v256 = vrot.slane %v223, %v255
        %v257 = vlaneseq
        %v258 = vshrl.u32 %v257, 7
        %v259 = vsub.s32 %v246, %v258
        %v260 = vrot.slane %v226, %v259
        %v261 = vsel %vm251, %v260, %v256
        %vm262 = vcmask 1041409
        %v263 = vsel %vm262, %v261, %v252
        %vm264 = vcmask 130048
        %v265 = vsel %vm264, %v263, 0
        %267 = vmatprep.subr.mxu0 0.0
        %268 = vmatpush1.msra.mxu0 %v227
        %269 = vmatprep.subr.mxu0 0.0
        %270 = vmatpush1.msra.mxu0 %v228
        %271 = vmatprep.subr.mxu0 0.0
        %272 = vmatpush1.msra.mxu0 0.0
        %273 = vmatprep.subr.mxu0 0.0
        %274 = vmatpush1.msra.mxu0 0.0
        %275 = vmatprep.subr.mxu0 0.0
        %276 = vmatpush1.msra.mxu0 0.0
        %277 = vmatprep.subr.mxu0 0.0
        %278 = vmatpush1.msra.mxu0 0.0
        %279 = vmatprep.subr.mxu0 0.0
        %280 = vmatpush1.msra.mxu0 0.0
        %281 = vmatprep.subr.mxu0 0.0
        %282 = vmatpush1.msra.mxu0 0.0
        %283 = vmatprep.subr.mxu0 0.0
        %284 = vmatpush1.msra.mxu0 0.0
        %285 = vmatprep.subr.mxu0 0.0
        %286 = vmatpush1.msra.mxu0 0.0
        %287 = vmatprep.subr.mxu0 0.0
        %288 = vmatpush1.msra.mxu0 0.0
        %289 = vmatprep.subr.mxu0 0.0
        %290 = vmatpush1.msra.mxu0 0.0
        %291 = vmatprep.subr.mxu0 0.0
        %292 = vmatpush1.msra.mxu0 0.0
        %293 = vmatprep.subr.mxu0 0.0
        %294 = vmatpush1.msra.mxu0 0.0
        %295 = vmatprep.subr.mxu0 0.0
        %296 = vmatpush1.msra.mxu0 0.0
        %297 = vmatprep.subr.mxu0 0.0
        %298 = vmatpush1.msra.mxu0 0.0
        %299 = vmatprep.subr.mxu0 0.0
        %300 = vmatpush1.msra.mxu0 0.0
        %301 = vmatprep.subr.mxu0 0.0
        %302 = vmatpush1.msra.mxu0 0.0
        %303 = vmatprep.subr.mxu0 0.0
        %304 = vmatpush1.msra.mxu0 0.0
        %305 = vmatprep.subr.mxu0 0.0
        %306 = vmatpush1.msra.mxu0 0.0
        %307 = vmatprep.subr.mxu0 0.0
        %308 = vmatpush1.msra.mxu0 0.0
        %309 = vmatprep.subr.mxu0 0.0
        %310 = vmatpush1.msra.mxu0 0.0
        %311 = vmatprep.subr.mxu0 0.0
        %312 = vmatpush1.msra.mxu0 0.0
        %313 = vmatprep.subr.mxu0 0.0
        %314 = vmatpush1.msra.mxu0 0.0
        %315 = vmatprep.subr.mxu0 0.0
        %316 = vmatpush1.msra.mxu0 0.0
        %317 = vmatprep.subr.mxu0 0.0
        %318 = vmatpush1.msra.mxu0 0.0
        %319 = vmatprep.subr.mxu0 0.0
        %320 = vmatpush1.msra.mxu0 0.0
        %321 = vmatprep.subr.mxu0 0.0
        %322 = vmatpush1.msra.mxu0 0.0
        %323 = vmatprep.subr.mxu0 0.0
        %324 = vmatpush1.msra.mxu0 0.0
        %325 = vmatprep.subr.mxu0 0.0
        %326 = vmatpush1.msra.mxu0 0.0
        %327 = vmatprep.subr.mxu0 0.0
        %328 = vmatpush1.msra.mxu0 0.0
        %329 = vmatprep.subr.mxu0 0.0
        %330 = vmatpush1.msra.mxu0 0.0
        %331 = vmatprep.mubr.f32.mxu0 0.0
        %332 = vmatmul.mubr.f32.gmra.mrb[0].mxu0 %v265
        %v333 = vpop.f32.mrb[0].mxu0
        %v334 = vadd.f32 %v234, %v333
        %v335 = vpop.f32.mrb[0].mxu0
        %336 = vdwg.mxu0
        %v337 = vxor.u32 %v334, 2147483648
        %v338 = vmul.f32 %v337, 1.442695
        %v339 = vpow.pop %v338
        %v340 = vadd.f32 %v339, 1.0
        %v341 = vrcp.pop %v340
        %v342 = vmul.f32 1.0, %v341
        %v343 = vlaneseq
        %v344 = vshrl.u32 %v343, 7
        %v345 = vsub.s32 0, %v344
        %v346 = vrot.slane %v342, %v345
        %348 = vbcast.lane.b32.xlu0 %v346, 256
        %v349 = vpop.permute.xlu0 %348
        %s351 = sor.u32 256, 8
        %352 = vbcast.lane.b32.xlu0 %v346, %s351
        %v353 = vpop.permute.xlu0 %352
        %v354 = vlaneseq
        %v355 = vshrl.u32 %v354, 7
        %v356 = vsub.s32 1, %v355
        %v357 = vrot.slane %v342, %v356
        %359 = vbcast.lane.b32.xlu0 %v357, 256
        %v360 = vpop.permute.xlu0 %359
        %s362 = sor.u32 256, 8
        %363 = vbcast.lane.b32.xlu0 %v357, %s362
        %v364 = vpop.permute.xlu0 %363
        %v365 = vmul.f32 %v207, %v349
        %v366 = vmul.f32 %v208, %v349
        %v367 = vmul.f32 %v209, %v353
        %v368 = vmul.f32 %v210, %v353
        %v369 = vmul.f32 %v211, %v360
        %v370 = vmul.f32 %v212, %v360
        %v371 = vmul.f32 %v213, %v364
        %v372 = vmul.f32 %v214, %v364
        %v373 = vadd.f32 %v365, %v349
        %v374 = vadd.f32 %v366, %v349
        %v375 = vadd.f32 %v367, %v353
        %v376 = vadd.f32 %v368, %v353
        %v377 = vadd.f32 %v369, %v360
        %v378 = vadd.f32 %v370, %v360
        %v379 = vadd.f32 %v371, %v364
        %v380 = vadd.f32 %v372, %v364
        %381 = vst [vmem:[%s204] sm:$0xff] %v373
        %382 = vst [vmem:[%s204 + $0x8] sm:$0xff] %v374
        %383 = vst [vmem:[%s204 + $0x10] sm:$0xff] %v375
        %384 = vst [vmem:[%s204 + $0x18] sm:$0xff] %v376
        %385 = vst [vmem:[%s204 + $0x20] sm:$0xff] %v377
        %386 = vst [vmem:[%s204 + $0x28] sm:$0xff] %v378
        %387 = vst [vmem:[%s204 + $0x30] sm:$0xff] %v379
        %388 = vst [vmem:[%s204 + $0x38] sm:$0xff] %v380
        %s389 = sand.u32 %s97, 1
        %s390 = scalar_lea.sflag [#allocation4], %s389
        %s391 = sand.u32 %s97, 1
        %s392 = smul.addr %s391, 64
        %s393 = scalar_lea.vmem [#allocation7], %s392
        // Predicated region
        $region41: #{tpu_custom_call.1} parent=31 // pred_check
          %p394 = pneg %p107
        $region42: #{tpu_custom_call.1} parent=31 // pred_check_branch
          %396 = sbr.rel (%p394) target = $region44
        $region43: #{tpu_custom_call.1} parent=31 // pred_region
          %s397 = smul.u32 2, %s21
          %s399 = ssub.s32 1024, 1024
          %400 = vsyncadd %s390, %s399
          %s401 = smul.addr %s397, 4
          %s402 = smul.addr %s401, 128
          %s403 = scalar_lea.hbm %s3, %s402
          %s404 = sshll.u32 %s393, 4
          %s405 = int_to_ptr.vmem [resolvable:$true] %s404
          %410 = dma.vmem_to_hbm [thread:$0]  %s405, 1024, %s403, %s390, 256, 256, 16
        $region44: #{tpu_custom_call.1} parent=31 // pred_fallthru
          _
      $region32: #{tpu_custom_call.1} parent=5 // pred_fallthru
        _
      %p411 = scmp.le.s32.totalorder 2, %s16
      // Predicated region
      $region45: #{tpu_custom_call.1} parent=5 // pred_check
        %p412 = pneg %p411
      $region46: #{tpu_custom_call.1} parent=5 // pred_check_branch
        %414 = sbr.rel (%p412) target = $region48
      $region47: #{tpu_custom_call.1} parent=5 // pred_region
        %s415 = ssub.s32 %s16, 2
        // Predicated region
        $region49: #{tpu_custom_call.1} parent=47 // pred_check
          %p416 = pneg %p113
        $region50: #{tpu_custom_call.1} parent=47 // pred_check_branch
          %418 = sbr.rel (%p416) target = $region52
        $region51: #{tpu_custom_call.1} parent=47 // pred_region
          %s419 = sand.u32 %s98, 1
          %s420 = scalar_lea.sflag [#allocation4], %s419
          %s421 = sand.u32 %s98, 1
          %s422 = smul.addr %s421, 64
          %s423 = scalar_lea.vmem [#allocation7], %s422
          %424 = dma.done %s420, 1024
        $region52: #{tpu_custom_call.1} parent=47 // pred_fallthru
          _
      $region48: #{tpu_custom_call.1} parent=5 // pred_fallthru
        _
    $region6: #{tpu_custom_call.1} parent=1 // loop_footer
      %s20 = sadd.s32 1, %s16
    $region7: #{tpu_custom_call.1} parent=1 // loop_footer_branch
      %15 = sbr.rel target = $region3
    $region8: #{tpu_custom_call.1} parent=1 // loop_exit
      _
    %425 = vsyncpa [#allocation3], 1
    %s426 = scalar_lea.sflag [#allocation3], 1
    %427 = vsyncpa %s426, 1
    %428 = vsyncpa [#allocation6], 1
    %429 = vsyncpa [#allocation4], 1
    %s430 = scalar_lea.sflag [#allocation4], 1
    %431 = vsyncpa %s430, 1

</llo_original>
